<compile_context>
chip_gen: v5e
topology: v5e:2x2
jax: 0.10.0
libtpu: 0.0.40
codegen_flags: <defaults>
</compile_context>

<pallas_src>
import jax
import jax.numpy as jnp
from jax.experimental import pallas as pl
from jax.experimental.pallas import tpu as pltpu


_LANE_CANDIDATES = (1024, 512, 256, 128)
_TARGET_BLOCK_BYTES = 1 << 20  # ~1 MiB/block; double-buffered in+out ~= 4 MiB


def _self_adaptive_kernel(a_ref, x_ref, o_ref):
    # a_ref: (1, 1) f32 scalar parameter in SMEM
    # x_ref / o_ref: (tile_rows, lanes) VMEM tiles
    scale = (2.0 * a_ref[0, 0]).astype(x_ref.dtype)
    o_ref[...] = x_ref[...] * scale


def _launch(x2d, a_smem, tile_rows, lanes):
    rows = x2d.shape[0]
    grid = (pl.cdiv(rows, tile_rows),)
    return pl.pallas_call(
        _self_adaptive_kernel,
        out_shape=jax.ShapeDtypeStruct(x2d.shape, x2d.dtype),
        grid_spec=pltpu.PrefetchScalarGridSpec(
            num_scalar_prefetch=0,
            grid=grid,
            in_specs=[
                pl.BlockSpec(memory_space=pltpu.SMEM),              # scalar a
                pl.BlockSpec((tile_rows, lanes), lambda i: (i, 0)),  # x tile
            ],
            out_specs=pl.BlockSpec((tile_rows, lanes), lambda i: (i, 0)),
        ),
        compiler_params=pltpu.CompilerParams(
            dimension_semantics=("parallel",)),
    )(a_smem, x2d)


def self_adaptive_forward(x, a, *, target_block_bytes=_TARGET_BLOCK_BYTES):
    """y = 2 * a * x, computed in a Pallas TPU kernel.

    x: any-shape floating-point array (NCHW in the test); a: scalar parameter.
    """
    orig_shape = x.shape
    dtype = x.dtype
    if not jnp.issubdtype(dtype, jnp.floating):
        raise TypeError("SelfAdaptive Pallas kernel supports float dtypes only")

    n = x.size
    itemsize = jnp.dtype(dtype).itemsize
    a_smem = jnp.reshape(a, (1, 1)).astype(jnp.float32)

    # Widest lane-dense layout that needs no padding (common NCHW case).
    lanes = None
    for cand in _LANE_CANDIDATES:
        if n % cand == 0:
            lanes = cand
            break

    if lanes is None:
        # Rare ragged path: pad flat length up to a multiple of (8 * 128).
        lanes = 128
        block_elems = 8 * lanes
        n_pad = pl.cdiv(n, block_elems) * block_elems
        x_flat = jnp.concatenate(
            [jnp.reshape(x, (-1,)), jnp.zeros((n_pad - n,), dtype=dtype)])
        padded = True
    else:
        n_pad = n
        x_flat = jnp.reshape(x, (-1,))
        padded = False

    rows = n_pad // lanes
    x2d = jnp.reshape(x_flat, (rows, lanes))

    # Big lane-dense blocks: ~target_block_bytes each.
    tile_rows = max(8, target_block_bytes // (lanes * itemsize))
    if tile_rows >= rows:
        tile_rows = rows                      # full extent: always legal
    else:
        tile_rows = max(8, (tile_rows // 8) * 8)  # keep sublane-aligned

    out2d = _launch(x2d, a_smem, tile_rows, lanes)

    if padded:
        y_flat = jnp.reshape(out2d, (-1,))[:n]
        return jnp.reshape(y_flat, orig_shape)
    return jnp.reshape(out2d, orig_shape)


if __name__ == "__main__":
    key = jax.random.PRNGKey(0)

    # Deterministic parameter init, matching nn.Parameter(torch.tensor([0.5]))
    a = jnp.array([0.5], dtype=jnp.float32)

    # Small NCHW input consistent with the module's generic elementwise forward.
    x = jax.random.normal(key, (2, 4, 16, 16), dtype=jnp.float32)
    y = jax.block_until_ready(self_adaptive_forward(x, a))
    y_ref = 2.0 * a[0] * x
    assert y.shape == x.shape and y.dtype == x.dtype
    assert jnp.allclose(y, y_ref, atol=1e-6, rtol=1e-6)

    # bf16 path: compute + store stay in bf16 inside the kernel.
    xb = x.astype(jnp.bfloat16)
    yb = jax.block_until_ready(self_adaptive_forward(xb, a))
    assert yb.dtype == jnp.bfloat16
    assert jnp.allclose(yb.astype(jnp.float32),
                        (2.0 * a[0]) * xb.astype(jnp.float32),
                        atol=1e-2, rtol=1e-2)

    # Ragged element count exercises the (rare) padded fallback path.
    x_odd = jax.random.normal(jax.random.PRNGKey(1), (3, 5, 7),
                              dtype=jnp.float32)
    y_odd = jax.block_until_ready(self_adaptive_forward(x_odd, a))
    assert jnp.allclose(y_odd, 2.0 * a[0] * x_odd, atol=1e-6, rtol=1e-6)

    print("KERNEL_OK")
</pallas_src>

<mosaic_0001>
module attributes {stable_mosaic.version = 11 : i64} {
  func.func @_self_adaptive_kernel(%arg0: i32, %arg1: memref<1x1xf32, #tpu.memory_space<smem>>, %arg2: memref<2x1024xf32, #tpu.memory_space<vmem>>, %arg3: memref<2x1024xf32, #tpu.memory_space<vmem>>) attributes {dimension_semantics = [#tpu.dimension_semantics<parallel>], iteration_bounds = array<i64: 1>, scalar_prefetch = 0 : i64, scratch_operands = 0 : i64, tpu.core_type = #tpu.core_type<tc>, window_params = [{transform_indices = @transform_0, window_bounds = array<i64: 1, 1>}, {transform_indices = @transform_1, window_bounds = array<i64: 2, 1024>}, {transform_indices = @transform_2, window_bounds = array<i64: 2, 1024>}]} {
    %c0 = arith.constant 0 : index
    %c0_0 = arith.constant 0 : index
    %0 = memref.load %arg1[%c0, %c0_0] : memref<1x1xf32, #tpu.memory_space<smem>>
    %cst = arith.constant 2.000000e+00 : f32
    %1 = arith.mulf %cst, %0 : f32
    %c0_1 = arith.constant 0 : index
    %c0_2 = arith.constant 0 : index
    %2 = vector.load %arg2[%c0_1, %c0_2] : memref<2x1024xf32, #tpu.memory_space<vmem>>, vector<2x1024xf32>
    %3 = vector.broadcast %1 : f32 to vector<2x1024xf32>
    %4 = arith.mulf %2, %3 : vector<2x1024xf32>
    %c0_3 = arith.constant 0 : index
    %c0_4 = arith.constant 0 : index
    %5 = vector.load %arg3[%c0_3, %c0_4] : memref<2x1024xf32, #tpu.memory_space<vmem>>, vector<2x1024xf32>
    tpu.vector_store %arg3[%c0_3, %c0_4], %4 {strides = array<i32>} : memref<2x1024xf32, #tpu.memory_space<vmem>>, vector<2x1024xf32>,
    return
  }
  func.func @transform_0(%arg0: i32) -> (i32, i32) {
    %c0_i32 = arith.constant 0 : i32
    %c0_i32_0 = arith.constant 0 : i32
    %c0_i32_1 = arith.constant 0 : i32
    return %c0_i32, %c0_i32_0 : i32, i32
  }
  func.func @transform_1(%arg0: i32) -> (i32, i32) {
    %c0_i32 = arith.constant 0 : i32
    %c0_i32_0 = arith.constant 0 : i32
    return %arg0, %c0_i32 : i32, i32
  }
  func.func @transform_2(%arg0: i32) -> (i32, i32) {
    %c0_i32 = arith.constant 0 : i32
    %c0_i32_0 = arith.constant 0 : i32
    return %arg0, %c0_i32 : i32, i32
  }
}

</mosaic_0001>

<llo_original>
// kernel: tpu_custom_call.1
$region0: #{tpu_custom_call.1}
  #allocation0 [shape = 'u32[]', space=smem, size = 0x4, offset = 0x4, fixed_abs, tag = 'smem constant byte address 0x4 - core index']
  #allocation1 [shape = 'u32[72,128]{1,0:T(1,128)}', space=vmem, size = 0x9000, scoped, tag = 'internal scratch']
  #allocation2 [shape = 'f32[1,1]{1,0:T(1,128)S(6)}', space=smem, size = 0x200, scoped, tag = 'scoped memory for tpu_custom_call.1']
  %s0 = inlined_call_operand.<no memory space> [shape: f32[1,1], index: 0, kind: input, shape index: {}]
  %s1 = inlined_call_operand.hbm [shape: f32[2,1024], index: 1, kind: input, shape index: {}]
  %s2 = inlined_call_operand.hbm [shape: f32[2,1024], index: 2, kind: output, shape index: {}]
  %s3 = sld [smem:[#allocation0]]
  $region22: #{tpu_custom_call.1} parent=0
    _
  %s5 = ssub.s32 1, %s3
  %s6 = scalar_select 0, %s5, %s3
  %7 = sst [smem:[#allocation2]] %s0
  $region1: #{tpu_custom_call.1} parent=0
    #allocation3 [shape = 'u8[8192]{0}', space=vmem, size = 0x2000, scoped, tag = 'input window, operand 1, single buffered']
    #allocation4 [shape = 's32[1]{0}', space=sflag, size = 0x4, scoped, tag = 'scoped memory for tpu_custom_call.1']
    #allocation5 [shape = 's32[1]{0}', space=sflag, size = 0x4, scoped, tag = 'scoped memory for tpu_custom_call.1']
    #allocation6 [shape = 'u8[8192]{0}', space=vmem, size = 0x2000, scoped, tag = 'output window, operand 0, single buffered']
    %8 = vsyncpa [#allocation4], 0
    %9 = vsyncpa [#allocation5], 0
    // Predicated region
    $region2: #{tpu_custom_call.1} parent=1 // pred_check
      _
    $region3: #{tpu_custom_call.1} parent=1 // pred_check_branch
      %11 = sbr.rel (0) target = $region5
    $region4: #{tpu_custom_call.1} parent=1 // pred_region
      _
    $region5: #{tpu_custom_call.1} parent=1 // pred_fallthru
      _
    // Predicated region
    $region6: #{tpu_custom_call.1} parent=1 // pred_check
      _
    $region7: #{tpu_custom_call.1} parent=1 // pred_check_branch
      %13 = sbr.rel (0) target = $region9
    $region8: #{tpu_custom_call.1} parent=1 // pred_region
      %15 = vsyncadd [#allocation4], 0
      %s17 = sshll.u32 %s1, 4
      %s18 = int_to_ptr.hbm [resolvable:$true] %s17
      %s19 = sshll.u32 [#allocation3], 4
      %s20 = int_to_ptr.vmem [resolvable:$true] %s19
      %22 = dma.hbm_to_vmem [thread:$0]  %s18, 256, %s20, [#allocation4]
    $region9: #{tpu_custom_call.1} parent=1 // pred_fallthru
      _
    // Predicated region
    $region10: #{tpu_custom_call.1} parent=1 // pred_check
      _
    $region11: #{tpu_custom_call.1} parent=1 // pred_check_branch
      %24 = sbr.rel (0) target = $region13
    $region12: #{tpu_custom_call.1} parent=1 // pred_region
      %26 = dma.done [#allocation4], 256
    $region13: #{tpu_custom_call.1} parent=1 // pred_fallthru
      _
    %s27 = sld [smem:[#allocation2]]
    %s28 = smul.f32 %s27, 2.0
    %v29 = vld [vmem:[#allocation3] sm:$0xff]
    %v30 = vld [vmem:[#allocation3 + $0x8] sm:$0xff]
    %v31 = vstv %s28
    %v32 = vmul.f32 %v29, %v31
    %v33 = vmul.f32 %v30, %v31
    %34 = vst [vmem:[#allocation6] sm:$0xff] %v32
    %35 = vst [vmem:[#allocation6 + $0x8] sm:$0xff] %v33
    // Predicated region
    $region14: #{tpu_custom_call.1} parent=1 // pred_check
      _
    $region15: #{tpu_custom_call.1} parent=1 // pred_check_branch
      %37 = sbr.rel (0) target = $region17
    $region16: #{tpu_custom_call.1} parent=1 // pred_region
      %39 = vsyncadd [#allocation5], 0
      %s41 = sshll.u32 [#allocation6], 4
      %s42 = int_to_ptr.vmem [resolvable:$true] %s41
      %s43 = sshll.u32 %s2, 4
      %s44 = int_to_ptr.hbm [resolvable:$true] %s43
      %46 = dma.vmem_to_hbm [thread:$0]  %s42, 256, %s44, [#allocation5]
    $region17: #{tpu_custom_call.1} parent=1 // pred_fallthru
      _
    // Predicated region
    $region18: #{tpu_custom_call.1} parent=1 // pred_check
      _
    $region19: #{tpu_custom_call.1} parent=1 // pred_check_branch
      %48 = sbr.rel (0) target = $region21
    $region20: #{tpu_custom_call.1} parent=1 // pred_region
      %50 = dma.done [#allocation5], 256
    $region21: #{tpu_custom_call.1} parent=1 // pred_fallthru
      _
    %51 = vsyncpa [#allocation4], 1
    %52 = vsyncpa [#allocation5], 1

</llo_original>
